<compile_context>
chip_gen: v7x
topology: tpu7x:2x2x1
jax: 0.10.0
libtpu: 0.0.40
codegen_flags: <defaults>
</compile_context>

<pallas_src>
import functools
import math

import jax
import jax.numpy as jnp
from jax.experimental import pallas as pl
from jax.experimental.pallas import tpu as pltpu


def _is_pow2(n: int) -> bool:
    return n > 0 and (n & (n - 1)) == 0


# --------------------------------------------------------------------------
# One-time probe: does pltpu.roll follow jnp.roll's sign convention?
# (Resolved at compile/trace time; replaces the per-tile runtime probe.)
# --------------------------------------------------------------------------
def _probe_kernel(o_ref):
    lanes = jax.lax.broadcasted_iota(jnp.int32, (8, 128), dimension=1)
    o_ref[...] = pltpu.roll(lanes, shift=1, axis=1)


@functools.lru_cache(maxsize=None)
def _roll_matches_jnp() -> bool:
    """True iff pltpu.roll(x, +1, lane) puts lane (l-1)'s value into lane l."""
    try:
        with jax.ensure_compile_time_eval():
            out = pl.pallas_call(
                _probe_kernel,
                out_shape=jax.ShapeDtypeStruct((8, 128), jnp.int32),
            )()
        out = jax.device_get(out)
        return bool(out[0, 1] == 0)  # jnp.roll(iota, 1)[1] == 0
    except Exception:
        return True


def _vmem_capacity_bytes() -> int:
    try:
        info = pltpu.get_tpu_info()
        for attr in ("vmem_capacity_bytes", "vmem_bytes", "vmem_size_bytes"):
            v = getattr(info, attr, None)
            if v:
                return int(v)
    except Exception:
        pass
    return 64 << 20  # conservative: v7x per-TC VMEM


# --------------------------------------------------------------------------
# Segmented (aligned, contiguous, power-of-two) per-group max/min along lanes.
# XOR butterfly of XLU lane rolls; masks are lane-only (1, width) tensors.
# --------------------------------------------------------------------------
def _segmented_max_min(w, seg: int, *, need_min: bool, roll_fwd: bool):
    width = w.shape[-1]
    axis = w.ndim - 1
    if seg == 1:
        return w, (w if need_min else None)

    lanes = jax.lax.broadcasted_iota(jnp.int32, (1, width), dimension=1)
    conds = []
    s = 1
    while s < seg:
        # Select r1 (= roll by +s) when the partner lane is l - s.
        conds.append(((lanes & s) != 0) if roll_fwd else ((lanes & s) == 0))
        s *= 2

    w_max = w
    w_min = w if need_min else None
    s = 1
    for cond in conds:
        r1 = pltpu.roll(w_max, shift=s, axis=axis)
        r2 = pltpu.roll(w_max, shift=width - s, axis=axis)
        w_max = jnp.maximum(w_max, jnp.where(cond, r1, r2))
        if need_min:
            m1 = pltpu.roll(w_min, shift=s, axis=axis)
            m2 = pltpu.roll(w_min, shift=width - s, axis=axis)
            w_min = jnp.minimum(w_min, jnp.where(cond, m1, m2))
        s *= 2
    return w_max, w_min


# --------------------------------------------------------------------------
# Kernel
# --------------------------------------------------------------------------
def _quant_kernel(x_ref, o_ref, *, n_bits: int, sym: bool, clip_ratio: float,
                  seg: int, roll_fwd: bool, fast_recip: bool):
    wr = x_ref[...]                    # native dtype: max/min/abs are bit-exact
    width = wr.shape[-1]
    w = wr.astype(jnp.float32)

    if sym:
        q_max = float(2 ** (n_bits - 1) - 1)
        q_min = float(-(2 ** (n_bits - 1)))
        if seg == width:
            g_max = jnp.max(jnp.abs(wr), axis=-1, keepdims=True)
        else:
            g_max, _ = _segmented_max_min(jnp.abs(wr), seg, need_min=False,
                                          roll_fwd=roll_fwd)
        g_max = jnp.maximum(g_max.astype(jnp.float32), 1e-5)
        if clip_ratio < 1.0:
            g_max = g_max * clip_ratio
        if fast_recip:
            inv_scales = pl.reciprocal(g_max, approx=True) * q_max
        else:
            inv_scales = q_max / g_max          # one divide per group value
        scales = g_max * (1.0 / q_max)
        if seg == width:                         # hoist (tile,1)->(tile,width)
            inv_scales = jnp.broadcast_to(inv_scales, w.shape)
            scales = jnp.broadcast_to(scales, w.shape)
        # base == 0 exactly in the symmetric case -> folded away.
        q = jnp.clip(jnp.round(w * inv_scales), q_min, q_max) * scales
    else:
        q_max = float(2 ** n_bits - 1)
        q_min = 0.0
        if seg == width:
            g_max = jnp.max(wr, axis=-1, keepdims=True)
            g_min = jnp.min(wr, axis=-1, keepdims=True)
        else:
            g_max, g_min = _segmented_max_min(wr, seg, need_min=True,
                                              roll_fwd=roll_fwd)
        g_max = g_max.astype(jnp.float32)
        g_min = g_min.astype(jnp.float32)
        if clip_ratio < 1.0:
            g_max = g_max * clip_ratio
            g_min = g_min * clip_ratio
        rng = jnp.maximum(g_max - g_min, 1e-5)
        if fast_recip:
            inv_scales = pl.reciprocal(rng, approx=True) * q_max
        else:
            inv_scales = q_max / rng            # one divide per group value
        scales = rng * (1.0 / q_max)
        base = jnp.clip(jnp.round(-g_min * inv_scales), q_min, q_max)
        if seg == width:                         # hoist broadcasts once
            inv_scales = jnp.broadcast_to(inv_scales, w.shape)
            scales = jnp.broadcast_to(scales, w.shape)
            base = jnp.broadcast_to(base, w.shape)
        q = (jnp.clip(jnp.round(w * inv_scales) + base, q_min, q_max) - base) * scales

    o_ref[...] = q.astype(o_ref.dtype)


# --------------------------------------------------------------------------
# Wrapper
# --------------------------------------------------------------------------
def _choose_layout(total: int, d: int, group_size: int):
    """Pick (width, seg, pad): lane width of the 2-D working view, the group
    length inside each row, and how many flat elements to pad (whole groups)."""
    g = group_size if group_size > 0 else d
    if g % 128 == 0:
        return g, g, 0                      # one lane-dense group per row
    if _is_pow2(g) and g < 128:
        for width in (128, 256, 512):       # prefer 128: rolls stay intra-vreg
            if total % width == 0:
                return width, g, 0
        width = 128                          # pad up to a lane-dense width
        pad = (-total) % width               # whole groups since g | 128, g | total
        return width, g, pad
    # TODO(synk): non-power-of-two / non-128-multiple group sizes fall back to
    # one (possibly masked-store) group per row; a lane-dense path would need a
    # non-pow2 segmented reduction.
    return g, g, 0


def _row_tile(n_rows: int, width: int, itemsize: int, target_bytes: int) -> int:
    """Row tile from a dtype-aware byte budget, forcing an even step count."""
    if n_rows <= 8:
        return n_rows                        # single full block
    budget_rows = max(8, (target_bytes // (width * itemsize)) // 8 * 8)
    steps = -(-n_rows // budget_rows)        # steps implied by the byte budget
    steps = max(2, steps)                    # >= 2 so both v7x TCs get work
    if steps % 2:
        steps += 1                           # even split across TensorCores
    tile = -(-n_rows // steps)
    tile = -(-tile // 8) * 8                 # (8,128) sublane constraint
    return min(tile, n_rows)


def pallas_quantize(x, *, n_bits: int, group_size: int, sym: bool,
                    clip_ratio: float = 1.0, fast_recip: bool = False):
    """Forward pass of palu Quantizer implemented with a Pallas TPU kernel."""
    if n_bits >= 16:
        return x

    saved_shape = x.shape
    d = saved_shape[-1]
    assert group_size == 0 or d % group_size == 0, \
        "Group size should be divisible by (dim)."

    total = math.prod(saved_shape)
    width, seg, pad = _choose_layout(total, d, group_size)

    xf = x.reshape(-1)
    if pad:
        xf = jnp.pad(xf, (0, pad))           # pad whole dummy groups; sliced off
    n_rows = (total + pad) // width
    x2 = xf.reshape(n_rows, width)

    itemsize = jnp.dtype(x.dtype).itemsize
    vmem_cap = _vmem_capacity_bytes()
    target_bytes = max(2 << 20, min(8 << 20, vmem_cap // 12))
    vmem_limit = min(64 << 20, max(32 << 20, vmem_cap * 3 // 4))

    tile = _row_tile(n_rows, width, itemsize, target_bytes)
    grid = (pl.cdiv(n_rows, tile),)

    kernel = functools.partial(
        _quant_kernel, n_bits=n_bits, sym=sym, clip_ratio=clip_ratio,
        seg=seg, roll_fwd=_roll_matches_jnp(), fast_recip=fast_recip)

    out = pl.pallas_call(
        kernel,
        out_shape=jax.ShapeDtypeStruct((n_rows, width), x.dtype),
        grid_spec=pltpu.PrefetchScalarGridSpec(
            num_scalar_prefetch=0,
            grid=grid,
            in_specs=[pl.BlockSpec((tile, width), lambda i: (i, 0))],
            out_specs=pl.BlockSpec((tile, width), lambda i: (i, 0)),
        ),
        compiler_params=pltpu.CompilerParams(
            dimension_semantics=("parallel",),
            vmem_limit_bytes=vmem_limit,
        ),
    )(x2)

    out = out.reshape(-1)
    if pad:
        out = out[:total]
    return out.reshape(saved_shape)


class Quantizer:
    """JAX/Pallas port of palu.model.modules.quant.Quantizer (no parameters)."""

    def __init__(self, n_bits: int, group_size: int, sym: bool, clip_ratio: float):
        self.n_bits = n_bits
        self.group_size = group_size
        self.sym = sym
        self.clip_ratio = clip_ratio

    def __call__(self, x):
        return pallas_quantize(
            x, n_bits=self.n_bits, group_size=self.group_size,
            sym=self.sym, clip_ratio=self.clip_ratio)


# --------------------------------------------------------------------------
# Pure-JAX reference mirroring the PyTorch quantize_tensor (exact divides).
# --------------------------------------------------------------------------
def _reference_quantize(x, n_bits, group_size, sym, clip_ratio):
    if n_bits >= 16:
        return x
    saved = x.shape
    w = x.reshape(-1, saved[-1]).astype(jnp.float32)
    if group_size > 0:
        w = w.reshape(-1, group_size)
    if sym:
        q_max = 2 ** (n_bits - 1) - 1
        q_min = -(2 ** (n_bits - 1))
        w_max = jnp.maximum(jnp.max(jnp.abs(w), -1, keepdims=True), 1e-5)
        if clip_ratio < 1.0:
            w_max = w_max * clip_ratio
        scales = w_max / q_max
        base = jnp.zeros_like(scales)
    else:
        q_max = 2 ** n_bits - 1
        q_min = 0
        w_max = jnp.max(w, -1, keepdims=True)
        w_min = jnp.min(w, -1, keepdims=True)
        if clip_ratio < 1.0:
            w_max = w_max * clip_ratio
            w_min = w_min * clip_ratio
        scales = jnp.maximum(w_max - w_min, 1e-5) / q_max
        base = jnp.clip(jnp.round(-w_min / scales), q_min, q_max)
    w = (jnp.clip(jnp.round(w / scales) + base, q_min, q_max) - base) * scales
    return w.reshape(saved).astype(x.dtype)


def _assert_close(name, y, ref, x, n_bits, sym, atol=1e-5):
    """allclose, but tolerant to rare rounding-boundary flips (reciprocal-mult
    vs divide), which move a value by at most one quantization step."""
    yf = jnp.asarray(y, jnp.float32)
    rf = jnp.asarray(ref, jnp.float32)
    diff = jnp.abs(yf - rf)
    n_bad = int(jnp.sum(diff > atol))
    if n_bad:
        levels = (2 ** (n_bits - 1) - 1) if sym else (2 ** n_bits - 1)
        step_ub = 2.0 * float(jnp.max(jnp.abs(x)).astype(jnp.float32)) / levels + atol
        assert n_bad <= max(4, x.size // 500), f"{name}: {n_bad} mismatching elements"
        assert float(jnp.max(diff)) <= step_ub, \
            f"{name}: max diff {float(jnp.max(diff)):.6f} > one step {step_ub:.6f}"


if __name__ == "__main__":
    key = jax.random.PRNGKey(0)
    k1, k2, k3, k4, k5 = jax.random.split(key, 5)

    # (1) Symmetric 4-bit, group_size=16 -> lane-dense butterfly path.
    x = jax.random.normal(k1, (2, 8, 32), dtype=jnp.float32)
    y = jax.block_until_ready(Quantizer(4, 16, True, 1.0)(x))
    assert y.shape == x.shape
    _assert_close("sym g=16", y, _reference_quantize(x, 4, 16, True, 1.0), x, 4, True)

    # (2) Asymmetric 4-bit, group_size=0 (whole last dim), clip 0.9.
    y = jax.block_until_ready(Quantizer(4, 0, False, 0.9)(x))
    _assert_close("asym g=0", y, _reference_quantize(x, 4, 0, False, 0.9), x, 4, False)

    # (3) n_bits >= 16 -> identity passthrough.
    y = jax.block_until_ready(Quantizer(16, 16, True, 1.0)(x))
    assert jnp.array_equal(y, x)

    # (4) Asymmetric 3-bit, group_size=64 -> butterfly with min+max, even grid.
    x4 = jax.random.normal(k2, (2, 8, 256), dtype=jnp.float32)
    y = jax.block_until_ready(Quantizer(3, 64, False, 1.0)(x4))
    _assert_close("asym g=64", y, _reference_quantize(x4, 3, 64, False, 1.0), x4, 3, False)

    # (5) Symmetric 4-bit, group_size=128 -> direct lane reduce + ragged grid.
    x5 = jax.random.normal(k3, (3, 25, 256), dtype=jnp.float32)
    y = jax.block_until_ready(Quantizer(4, 128, True, 0.95)(x5))
    _assert_close("sym g=128", y, _reference_quantize(x5, 4, 128, True, 0.95), x5, 4, True)

    # (6) Padding path: total=160 is not a multiple of 128 -> pad, quantize, slice.
    x6 = jax.random.normal(k4, (5, 2, 16), dtype=jnp.float32)
    y = jax.block_until_ready(Quantizer(4, 16, True, 1.0)(x6))
    _assert_close("sym g=16 padded", y, _reference_quantize(x6, 4, 16, True, 1.0), x6, 4, True)

    # (7) bf16 input: reduction in native bf16, quant math in f32.
    x7 = jax.random.normal(k5, (4, 16, 64), dtype=jnp.float32).astype(jnp.bfloat16)
    y = jax.block_until_ready(Quantizer(4, 32, False, 1.0)(x7))
    _assert_close("asym g=32 bf16", y, _reference_quantize(x7, 4, 32, False, 1.0),
                  x7, 4, False, atol=3e-2)

    print("KERNEL_OK")
</pallas_src>

<mosaic_0001>
module attributes {stable_mosaic.version = 11 : i64} {
  func.func @_quant_kernel(%arg0: i32, %arg1: memref<4x128xf32, #tpu.memory_space<vmem>>, %arg2: memref<4x128xf32, #tpu.memory_space<vmem>>) attributes {dimension_semantics = [#tpu.dimension_semantics<parallel>], iteration_bounds = array<i64: 1>, scalar_prefetch = 0 : i64, scratch_operands = 0 : i64, tpu.core_type = #tpu.core_type<tc>, window_params = [{transform_indices = @transform_0, window_bounds = array<i64: 4, 128>}, {transform_indices = @transform_1, window_bounds = array<i64: 4, 128>}]} {
    %c0 = arith.constant 0 : index
    %c0_0 = arith.constant 0 : index
    %0 = vector.load %arg1[%c0, %c0_0] : memref<4x128xf32, #tpu.memory_space<vmem>>, vector<4x128xf32>
    %1 = math.absf %0 : vector<4x128xf32>
    %2 = tpu.iota {dimensions = array<i32: 1>} : vector<1x128xi32>
    %c1_i32 = arith.constant 1 : i32
    %3 = vector.broadcast %c1_i32 : i32 to vector<1x128xi32>
    %4 = arith.andi %2, %3 : vector<1x128xi32>
    %c0_i32 = arith.constant 0 : i32
    %5 = vector.broadcast %c0_i32 : i32 to vector<1x128xi32>
    %6 = arith.cmpi ne, %4, %5 : vector<1x128xi32>
    %c2_i32 = arith.constant 2 : i32
    %7 = vector.broadcast %c2_i32 : i32 to vector<1x128xi32>
    %8 = arith.andi %2, %7 : vector<1x128xi32>
    %c0_i32_1 = arith.constant 0 : i32
    %9 = vector.broadcast %c0_i32_1 : i32 to vector<1x128xi32>
    %10 = arith.cmpi ne, %8, %9 : vector<1x128xi32>
    %c4_i32 = arith.constant 4 : i32
    %11 = vector.broadcast %c4_i32 : i32 to vector<1x128xi32>
    %12 = arith.andi %2, %11 : vector<1x128xi32>
    %c0_i32_2 = arith.constant 0 : i32
    %13 = vector.broadcast %c0_i32_2 : i32 to vector<1x128xi32>
    %14 = arith.cmpi ne, %12, %13 : vector<1x128xi32>
    %c8_i32 = arith.constant 8 : i32
    %15 = vector.broadcast %c8_i32 : i32 to vector<1x128xi32>
    %16 = arith.andi %2, %15 : vector<1x128xi32>
    %c0_i32_3 = arith.constant 0 : i32
    %17 = vector.broadcast %c0_i32_3 : i32 to vector<1x128xi32>
    %18 = arith.cmpi ne, %16, %17 : vector<1x128xi32>
    %c1_i32_4 = arith.constant 1 : i32
    %19 = tpu.dynamic_rotate %1 by %c1_i32_4 dim 1 : vector<4x128xf32>, i32 -> vector<4x128xf32>
    %c127_i32 = arith.constant 127 : i32
    %20 = tpu.dynamic_rotate %1 by %c127_i32 dim 1 : vector<4x128xf32>, i32 -> vector<4x128xf32>
    %21 = vector.shape_cast %6 : vector<1x128xi1> to vector<1x128xi1>
    %22 = vector.broadcast %21 : vector<1x128xi1> to vector<4x128xi1>
    %23 = arith.select %22, %19, %20 : vector<4x128xi1>, vector<4x128xf32>
    %24 = arith.maximumf %1, %23 : vector<4x128xf32>
    %c2_i32_5 = arith.constant 2 : i32
    %25 = tpu.dynamic_rotate %24 by %c2_i32_5 dim 1 : vector<4x128xf32>, i32 -> vector<4x128xf32>
    %c126_i32 = arith.constant 126 : i32
    %26 = tpu.dynamic_rotate %24 by %c126_i32 dim 1 : vector<4x128xf32>, i32 -> vector<4x128xf32>
    %27 = vector.shape_cast %10 : vector<1x128xi1> to vector<1x128xi1>
    %28 = vector.broadcast %27 : vector<1x128xi1> to vector<4x128xi1>
    %29 = arith.select %28, %25, %26 : vector<4x128xi1>, vector<4x128xf32>
    %30 = arith.maximumf %24, %29 : vector<4x128xf32>
    %c4_i32_6 = arith.constant 4 : i32
    %31 = tpu.dynamic_rotate %30 by %c4_i32_6 dim 1 : vector<4x128xf32>, i32 -> vector<4x128xf32>
    %c124_i32 = arith.constant 124 : i32
    %32 = tpu.dynamic_rotate %30 by %c124_i32 dim 1 : vector<4x128xf32>, i32 -> vector<4x128xf32>
    %33 = vector.shape_cast %14 : vector<1x128xi1> to vector<1x128xi1>
    %34 = vector.broadcast %33 : vector<1x128xi1> to vector<4x128xi1>
    %35 = arith.select %34, %31, %32 : vector<4x128xi1>, vector<4x128xf32>
    %36 = arith.maximumf %30, %35 : vector<4x128xf32>
    %c8_i32_7 = arith.constant 8 : i32
    %37 = tpu.dynamic_rotate %36 by %c8_i32_7 dim 1 : vector<4x128xf32>, i32 -> vector<4x128xf32>
    %c120_i32 = arith.constant 120 : i32
    %38 = tpu.dynamic_rotate %36 by %c120_i32 dim 1 : vector<4x128xf32>, i32 -> vector<4x128xf32>
    %39 = vector.shape_cast %18 : vector<1x128xi1> to vector<1x128xi1>
    %40 = vector.broadcast %39 : vector<1x128xi1> to vector<4x128xi1>
    %41 = arith.select %40, %37, %38 : vector<4x128xi1>, vector<4x128xf32>
    %42 = arith.maximumf %36, %41 : vector<4x128xf32>
    %cst = arith.constant 9.99999974E-6 : f32
    %43 = vector.broadcast %cst : f32 to vector<4x128xf32>
    %44 = arith.maximumf %42, %43 : vector<4x128xf32>
    %cst_8 = arith.constant 7.000000e+00 : f32
    %45 = vector.broadcast %cst_8 : f32 to vector<4x128xf32>
    %46 = arith.divf %45, %44 : vector<4x128xf32>
    %cst_9 = arith.constant 0.142857149 : f32
    %47 = vector.broadcast %cst_9 : f32 to vector<4x128xf32>
    %48 = arith.mulf %44, %47 : vector<4x128xf32>
    %49 = arith.mulf %0, %46 : vector<4x128xf32>
    %50 = math.roundeven %49 : vector<4x128xf32>
    %cst_10 = arith.constant -8.000000e+00 : f32
    %cst_11 = arith.constant 7.000000e+00 : f32
    %51 = vector.broadcast %cst_10 : f32 to vector<4x128xf32>
    %52 = arith.maximumf %51, %50 : vector<4x128xf32>
    %53 = vector.broadcast %cst_11 : f32 to vector<4x128xf32>
    %54 = arith.minimumf %53, %52 : vector<4x128xf32>
    %55 = arith.mulf %54, %48 : vector<4x128xf32>
    %c0_12 = arith.constant 0 : index
    %c0_13 = arith.constant 0 : index
    %56 = vector.load %arg2[%c0_12, %c0_13] : memref<4x128xf32, #tpu.memory_space<vmem>>, vector<4x128xf32>
    tpu.vector_store %arg2[%c0_12, %c0_13], %55 {strides = array<i32>} : memref<4x128xf32, #tpu.memory_space<vmem>>, vector<4x128xf32>,
    return
  }
  func.func @transform_0(%arg0: i32) -> (i32, i32) {
    %c0_i32 = arith.constant 0 : i32
    %c0_i32_0 = arith.constant 0 : i32
    return %arg0, %c0_i32 : i32, i32
  }
  func.func @transform_1(%arg0: i32) -> (i32, i32) {
    %c0_i32 = arith.constant 0 : i32
    %c0_i32_0 = arith.constant 0 : i32
    return %arg0, %c0_i32 : i32, i32
  }
}

</mosaic_0001>

<llo_original>
// kernel: tpu_custom_call.1
$region0: #{tpu_custom_call.1}
  #allocation0 [shape = 'u32[]', space=smem, size = 0x4, offset = 0x4, fixed_abs, tag = 'smem constant byte address 0x4 - core index']
  #allocation1 [shape = 'u32[144,128]{1,0:T(1,128)}', space=vmem, size = 0x12000, scoped, tag = 'internal scratch']
  %s0 = inlined_call_operand.hbm [shape: f32[4,128], index: 0, kind: input, shape index: {}]
  %s1 = inlined_call_operand.hbm [shape: f32[4,128], index: 1, kind: output, shape index: {}]
  %s2 = sld [smem:[#allocation0]]
  $region18: #{tpu_custom_call.1} parent=0
    _
  %s4 = ssub.s32 1, %s2
  %s5 = scalar_select 0, %s4, %s2
  $region1: #{tpu_custom_call.1} parent=0
    #allocation2 [shape = 'u8[2048]{0}', space=vmem, size = 0x800, scoped, tag = 'input window, operand 0, single buffered']
    #allocation3 [shape = 's32[1]{0}', space=sflag, size = 0x4, scoped, tag = 'scoped memory for tpu_custom_call.1']
    #allocation4 [shape = 's32[1]{0}', space=sflag, size = 0x4, scoped, tag = 'scoped memory for tpu_custom_call.1']
    #allocation5 [shape = 'u8[2048]{0}', space=vmem, size = 0x800, scoped, tag = 'output window, operand 0, single buffered']
    %6 = vsyncpa [#allocation3], 0
    %7 = vsyncpa [#allocation4], 0
    // Predicated region
    $region2: #{tpu_custom_call.1} parent=1 // pred_check
      _
    $region3: #{tpu_custom_call.1} parent=1 // pred_check_branch
      %9 = sbr.rel (0) target = $region5
    $region4: #{tpu_custom_call.1} parent=1 // pred_region
      %s11 = ssub.s32 64, 64
      %12 = vsyncadd [#allocation3], %s11
      %s14 = sshll.u32 [#allocation2], 4
      %s15 = int_to_ptr.vmem [resolvable:$true] %s14
      %17 = dma.hbm_to_vmem [thread:$0]  %s0, 64, %s15, [#allocation3]
    $region5: #{tpu_custom_call.1} parent=1 // pred_fallthru
      _
    // Predicated region
    $region6: #{tpu_custom_call.1} parent=1 // pred_check
      _
    $region7: #{tpu_custom_call.1} parent=1 // pred_check_branch
      %19 = sbr.rel (0) target = $region9
    $region8: #{tpu_custom_call.1} parent=1 // pred_region
      %20 = dma.done [#allocation3], 64
    $region9: #{tpu_custom_call.1} parent=1 // pred_fallthru
      _
    %v21 = vld [vmem:[#allocation2] sm:$0xf]
    %v22 = vand.u32 2147483647, %v21
    %v23 = vlaneseq
    %v24 = vand.u32 %v23, 127
    %v25 = vand.u32 %v24, 1
    %vm26 = vcmp.ne.s32.totalorder %v25, 0
    %v27 = vand.u32 %v24, 2
    %vm28 = vcmp.ne.s32.totalorder %v27, 0
    %v29 = vand.u32 %v24, 4
    %vm30 = vcmp.ne.s32.totalorder %v29, 0
    %v31 = vand.u32 %v24, 8
    %vm32 = vcmp.ne.s32.totalorder %v31, 0
    %33 = vrot.lane.b32.xlu0 %v22, 1
    %v34 = vpop.permute.xlu0 %33
    %35 = vrot.lane.b32.xlu0 %v22, 127
    %v36 = vpop.permute.xlu0 %35
    %v37 = vsel %vm26, 1, 0
    %vm38 = vcmp.eq.s32.totalorder %v37, 1
    %v39 = vsel %vm38, %v34, %v36
    %v40 = vmax.f32 %v22, %v39
    %41 = vrot.lane.b32.xlu0 %v40, 2
    %v42 = vpop.permute.xlu0 %41
    %43 = vrot.lane.b32.xlu0 %v40, 126
    %v44 = vpop.permute.xlu0 %43
    %v45 = vsel %vm28, 1, 0
    %vm46 = vcmp.eq.s32.totalorder %v45, 1
    %v47 = vsel %vm46, %v42, %v44
    %v48 = vmax.f32 %v40, %v47
    %49 = vrot.lane.b32.xlu0 %v48, 4
    %v50 = vpop.permute.xlu0 %49
    %51 = vrot.lane.b32.xlu0 %v48, 124
    %v52 = vpop.permute.xlu0 %51
    %v53 = vsel %vm30, 1, 0
    %vm54 = vcmp.eq.s32.totalorder %v53, 1
    %v55 = vsel %vm54, %v50, %v52
    %v56 = vmax.f32 %v48, %v55
    %57 = vrot.lane.b32.xlu0 %v56, 8
    %v58 = vpop.permute.xlu0 %57
    %59 = vrot.lane.b32.xlu0 %v56, 120
    %v60 = vpop.permute.xlu0 %59
    %v61 = vsel %vm32, 1, 0
    %vm62 = vcmp.eq.s32.totalorder %v61, 1
    %v63 = vsel %vm62, %v58, %v60
    %v64 = vmax.f32 %v56, %v63
    %v65 = vmax.f32 %v64, 1e-05
    %v66 = vrcp.pop %v65
    %v67 = vmul.f32 7.0, %v66
    %v68 = vmul.f32 %v65, 0.14285715
    %v69 = vmul.f32 %v21, %v67
    %v70 = vround.ne.pseudo %v69
    %v71 = vmax.f32 %v70, -8.0
    %v72 = vmin.f32 %v71, 7.0
    %v73 = vmul.f32 %v72, %v68
    %74 = vst [vmem:[#allocation5] sm:$0xf] %v73
    // Predicated region
    $region10: #{tpu_custom_call.1} parent=1 // pred_check
      _
    $region11: #{tpu_custom_call.1} parent=1 // pred_check_branch
      %76 = sbr.rel (0) target = $region13
    $region12: #{tpu_custom_call.1} parent=1 // pred_region
      %s78 = ssub.s32 64, 64
      %79 = vsyncadd [#allocation4], %s78
      %s81 = sshll.u32 [#allocation5], 4
      %s82 = int_to_ptr.vmem [resolvable:$true] %s81
      %84 = dma.vmem_to_hbm [thread:$0]  %s82, 64, %s1, [#allocation4]
    $region13: #{tpu_custom_call.1} parent=1 // pred_fallthru
      _
    // Predicated region
    $region14: #{tpu_custom_call.1} parent=1 // pred_check
      _
    $region15: #{tpu_custom_call.1} parent=1 // pred_check_branch
      %86 = sbr.rel (0) target = $region17
    $region16: #{tpu_custom_call.1} parent=1 // pred_region
      %87 = dma.done [#allocation4], 64
    $region17: #{tpu_custom_call.1} parent=1 // pred_fallthru
      _
    %88 = vsyncpa [#allocation3], 1
    %89 = vsyncpa [#allocation4], 1

</llo_original>
